<compile_context>
chip_gen: v7x
topology: tpu7x:2x2x1
jax: 0.10.0
libtpu: 0.0.40
codegen_flags: <defaults>
</compile_context>

<pallas_src>
import functools

import jax
import jax.numpy as jnp
from jax.experimental import pallas as pl
from jax.experimental.pallas import tpu as pltpu

LANES = 128
MAX_TILE_ROWS = 2048  # 2048 * 128 * 4 B = 1 MiB per f32 input block


def _loss_sums_kernel(pred_ref, tgt_ref, sq_ref, abs_ref, acc_sq, acc_abs,
                      *, total_rows, tile_rows, steps_per_core):
    """Accumulate sum((p-t)^2) and sum(|p-t|) into per-core vector scratch."""
    c = pl.program_id(0)  # megacore ("parallel") axis
    i = pl.program_id(1)  # reduction ("arbitrary") axis

    @pl.when(i == 0)
    def _():
        acc_sq[...] = jnp.zeros_like(acc_sq)
        acc_abs[...] = jnp.zeros_like(acc_abs)

    d = pred_ref[...].astype(jnp.float32) - tgt_ref[...].astype(jnp.float32)

    # Mask rows past the end of the slab (partial last tile / idle core steps).
    step = c * steps_per_core + i
    row_ids = step * tile_rows + jax.lax.broadcasted_iota(jnp.int32, d.shape, 0)
    valid = row_ids < total_rows

    acc_sq[...] += jnp.where(valid, d * d, 0.0)
    acc_abs[...] += jnp.where(valid, jnp.abs(d), 0.0)

    # Single final cross-lane/sublane reduce + lane-dense store per core.
    @pl.when(i == steps_per_core - 1)
    def _():
        sq_ref[...] = jnp.zeros_like(sq_ref) + jnp.sum(acc_sq[...])
        abs_ref[...] = jnp.zeros_like(abs_ref) + jnp.sum(acc_abs[...])


def _loss_sums(pred2d, tgt2d):
    rows, lanes = pred2d.shape
    assert lanes == LANES

    # Single full-slab block for small inputs (always a legal block shape);
    # 2048-row (multiple of 8/16/32 -> any dtype packing) blocks otherwise.
    tile_rows = rows if rows <= MAX_TILE_ROWS else MAX_TILE_ROWS
    nsteps = pl.cdiv(rows, tile_rows)   # blocks covering the slab
    spc = pl.cdiv(nsteps, 2)            # steps per TensorCore (2-way split)

    kernel = functools.partial(
        _loss_sums_kernel,
        total_rows=rows, tile_rows=tile_rows, steps_per_core=spc)

    def in_index(c, i):
        # Clamp: when nsteps is odd, core 1's last step re-reads the final
        # block; its contribution is masked out in-kernel.
        return (jnp.minimum(c * spc + i, nsteps - 1), 0)

    def out_index(c, i):
        return (c, 0)

    sq_part, abs_part = pl.pallas_call(
        kernel,
        out_shape=(
            jax.ShapeDtypeStruct((16, LANES), jnp.float32),
            jax.ShapeDtypeStruct((16, LANES), jnp.float32),
        ),
        grid_spec=pltpu.PrefetchScalarGridSpec(
            num_scalar_prefetch=0,
            grid=(2, spc),
            in_specs=[
                pl.BlockSpec((tile_rows, LANES), in_index),
                pl.BlockSpec((tile_rows, LANES), in_index),
            ],
            out_specs=[
                pl.BlockSpec((8, LANES), out_index),
                pl.BlockSpec((8, LANES), out_index),
            ],
            scratch_shapes=[
                pltpu.VMEM((tile_rows, LANES), jnp.float32),
                pltpu.VMEM((tile_rows, LANES), jnp.float32),
            ],
        ),
        compiler_params=pltpu.CompilerParams(
            dimension_semantics=("parallel", "arbitrary")),
    )(pred2d, tgt2d)

    # Each core's (8,128) output block is filled with its scalar partial sum.
    sq_sum = sq_part[0, 0] + sq_part[8, 0]
    abs_sum = abs_part[0, 0] + abs_part[8, 0]
    return sq_sum, abs_sum


@functools.partial(jax.jit, static_argnames=("w_mse", "w_l1"))
def _loss_forward(y_pred, target, w_mse, w_l1):
    n = y_pred.size
    p = jnp.ravel(y_pred)
    t = jnp.ravel(target)
    n_main = (n // LANES) * LANES  # largest lane-aligned prefix

    sq_sum = jnp.float32(0.0)
    abs_sum = jnp.float32(0.0)

    if n_main > 0:
        p2 = (p if n_main == n else p[:n_main]).reshape(-1, LANES)
        t2 = (t if n_main == n else t[:n_main]).reshape(-1, LANES)
        sq_k, abs_k = _loss_sums(p2, t2)
        sq_sum = sq_sum + sq_k
        abs_sum = abs_sum + abs_k

    if n_main < n:
        # Ragged tail (< 128 elements): tiny pure-JAX reduction.
        dt = p[n_main:].astype(jnp.float32) - t[n_main:].astype(jnp.float32)
        sq_sum = sq_sum + jnp.sum(dt * dt)
        abs_sum = abs_sum + jnp.sum(jnp.abs(dt))

    loss_mse = sq_sum / n  # MSELoss default 'mean' reduction
    loss_l1 = abs_sum / n  # L1Loss default 'mean' reduction
    loss = w_mse * loss_mse + w_l1 * loss_l1
    return loss, loss_mse, loss_l1


class PallasLoss:
    """JAX/Pallas port of `Loss` with a concrete, deterministic config.

    Equivalent PyTorch config:
        {'mse': {..., 'weight': 1.0},   # nn.MSELoss()
         'l1':  {..., 'weight': 0.5}}   # nn.L1Loss()
    """

    # TODO(synk): the original module builds sub-losses dynamically via
    # importlib from a config dict; that registry has no Pallas equivalent, so
    # we instantiate a fixed {mse, l1} weighted-sum configuration.

    def __init__(self):
        self.weighting = {"mse": 1.0, "l1": 0.5}
        self.crit_keys = list(self.weighting.keys())

    def __call__(self, y_pred, target):
        assert y_pred.shape == target.shape
        loss, loss_mse, loss_l1 = _loss_forward(
            y_pred, target, self.weighting["mse"], self.weighting["l1"])
        dict_loss = {"loss_mse": loss_mse, "loss_l1": loss_l1}
        return loss, dict_loss


def _check(y_pred, target, loss_mod):
    loss, dict_loss = loss_mod(y_pred, target)
    jax.block_until_ready(loss)
    jax.block_until_ready(dict_loss)

    d = y_pred.astype(jnp.float32) - target.astype(jnp.float32)
    ref_mse = jnp.mean(d * d)
    ref_l1 = jnp.mean(jnp.abs(d))
    ref_total = 1.0 * ref_mse + 0.5 * ref_l1
    assert jnp.allclose(dict_loss["loss_mse"], ref_mse, rtol=1e-5, atol=1e-6)
    assert jnp.allclose(dict_loss["loss_l1"], ref_l1, rtol=1e-5, atol=1e-6)
    assert jnp.allclose(loss, ref_total, rtol=1e-5, atol=1e-6)


if __name__ == "__main__":
    key = jax.random.PRNGKey(0)
    k1, k2, k3, k4 = jax.random.split(key, 4)

    loss_mod = PallasLoss()

    # Main case: NCHW, lane-aligned element count (2*4*16*16 = 2048).
    B, C, H, W = 2, 4, 16, 16
    y_pred = jax.random.normal(k1, (B, C, H, W), dtype=jnp.float32)
    target = jax.random.normal(k2, (B, C, H, W), dtype=jnp.float32)
    _check(y_pred, target, loss_mod)

    # Ragged case: exercises in-kernel row masking + pure-JAX tail (945 elems).
    y2 = jax.random.normal(k3, (3, 5, 7, 9), dtype=jnp.float32)
    t2 = jax.random.normal(k4, (3, 5, 7, 9), dtype=jnp.float32)
    _check(y2, t2, loss_mod)

    print("KERNEL_OK")
</pallas_src>

<mosaic_0001>
module attributes {stable_mosaic.version = 11 : i64} {
  func.func @_loss_sums_kernel(%arg0: i32, %arg1: i32, %arg2: memref<16x128xf32, #tpu.memory_space<vmem>>, %arg3: memref<16x128xf32, #tpu.memory_space<vmem>>, %arg4: memref<8x128xf32, #tpu.memory_space<vmem>>, %arg5: memref<8x128xf32, #tpu.memory_space<vmem>>, %arg6: memref<16x128xf32, #tpu.memory_space<vmem>>, %arg7: memref<16x128xf32, #tpu.memory_space<vmem>>) attributes {dimension_semantics = [#tpu.dimension_semantics<parallel>, #tpu.dimension_semantics<arbitrary>], iteration_bounds = array<i64: 2, 1>, scalar_prefetch = 0 : i64, scratch_operands = 2 : i64, tpu.core_type = #tpu.core_type<tc>, window_params = [{transform_indices = @transform_0, window_bounds = array<i64: 16, 128>}, {transform_indices = @transform_1, window_bounds = array<i64: 16, 128>}, {transform_indices = @transform_2, window_bounds = array<i64: 8, 128>}, {transform_indices = @transform_3, window_bounds = array<i64: 8, 128>}]} {
    %c0_i32 = arith.constant 0 : i32
    %0 = arith.cmpi eq, %arg1, %c0_i32 : i32
    %1 = arith.extui %0 : i1 to i32
    %c0_i32_0 = arith.constant 0 : i32
    %2 = arith.cmpi ne, %1, %c0_i32_0 : i32
    scf.if %2 {
      %cst_16 = arith.constant 0.000000e+00 : f32
      %29 = vector.broadcast %cst_16 : f32 to vector<16x128xf32>
      %c0_17 = arith.constant 0 : index
      %c0_18 = arith.constant 0 : index
      %30 = vector.load %arg6[%c0_17, %c0_18] : memref<16x128xf32, #tpu.memory_space<vmem>>, vector<16x128xf32>
      tpu.vector_store %arg6[%c0_17, %c0_18], %29 {strides = array<i32>} : memref<16x128xf32, #tpu.memory_space<vmem>>, vector<16x128xf32>,
      %cst_19 = arith.constant 0.000000e+00 : f32
      %31 = vector.broadcast %cst_19 : f32 to vector<16x128xf32>
      %c0_20 = arith.constant 0 : index
      %c0_21 = arith.constant 0 : index
      %32 = vector.load %arg7[%c0_20, %c0_21] : memref<16x128xf32, #tpu.memory_space<vmem>>, vector<16x128xf32>
      tpu.vector_store %arg7[%c0_20, %c0_21], %31 {strides = array<i32>} : memref<16x128xf32, #tpu.memory_space<vmem>>, vector<16x128xf32>,
    } else {
    }
    %c0 = arith.constant 0 : index
    %c0_1 = arith.constant 0 : index
    %3 = vector.load %arg2[%c0, %c0_1] : memref<16x128xf32, #tpu.memory_space<vmem>>, vector<16x128xf32>
    %c0_2 = arith.constant 0 : index
    %c0_3 = arith.constant 0 : index
    %4 = vector.load %arg3[%c0_2, %c0_3] : memref<16x128xf32, #tpu.memory_space<vmem>>, vector<16x128xf32>
    %5 = arith.subf %3, %4 : vector<16x128xf32>
    %c1_i32 = arith.constant 1 : i32
    %6 = arith.muli %arg0, %c1_i32 : i32
    %7 = arith.addi %6, %arg1 : i32
    %c16_i32 = arith.constant 16 : i32
    %8 = arith.muli %7, %c16_i32 : i32
    %9 = tpu.iota {dimensions = array<i32: 0>} : vector<16x128xi32>
    %10 = vector.broadcast %8 : i32 to vector<16x128xi32>
    %11 = arith.addi %10, %9 : vector<16x128xi32>
    %c16_i32_4 = arith.constant 16 : i32
    %12 = vector.broadcast %c16_i32_4 : i32 to vector<16x128xi32>
    %13 = arith.cmpi slt, %11, %12 : vector<16x128xi32>
    %c0_5 = arith.constant 0 : index
    %c0_6 = arith.constant 0 : index
    %14 = vector.load %arg6[%c0_5, %c0_6] : memref<16x128xf32, #tpu.memory_space<vmem>>, vector<16x128xf32>
    %15 = arith.mulf %5, %5 : vector<16x128xf32>
    %cst = arith.constant 0.000000e+00 : f32
    %16 = vector.broadcast %cst : f32 to vector<16x128xf32>
    %17 = arith.select %13, %15, %16 : vector<16x128xi1>, vector<16x128xf32>
    %18 = arith.addf %14, %17 : vector<16x128xf32>
    %c0_7 = arith.constant 0 : index
    %c0_8 = arith.constant 0 : index
    %19 = vector.load %arg6[%c0_7, %c0_8] : memref<16x128xf32, #tpu.memory_space<vmem>>, vector<16x128xf32>
    tpu.vector_store %arg6[%c0_7, %c0_8], %18 {strides = array<i32>} : memref<16x128xf32, #tpu.memory_space<vmem>>, vector<16x128xf32>,
    %c0_9 = arith.constant 0 : index
    %c0_10 = arith.constant 0 : index
    %20 = vector.load %arg7[%c0_9, %c0_10] : memref<16x128xf32, #tpu.memory_space<vmem>>, vector<16x128xf32>
    %21 = math.absf %5 : vector<16x128xf32>
    %cst_11 = arith.constant 0.000000e+00 : f32
    %22 = vector.broadcast %cst_11 : f32 to vector<16x128xf32>
    %23 = arith.select %13, %21, %22 : vector<16x128xi1>, vector<16x128xf32>
    %24 = arith.addf %20, %23 : vector<16x128xf32>
    %c0_12 = arith.constant 0 : index
    %c0_13 = arith.constant 0 : index
    %25 = vector.load %arg7[%c0_12, %c0_13] : memref<16x128xf32, #tpu.memory_space<vmem>>, vector<16x128xf32>
    tpu.vector_store %arg7[%c0_12, %c0_13], %24 {strides = array<i32>} : memref<16x128xf32, #tpu.memory_space<vmem>>, vector<16x128xf32>,
    %c0_i32_14 = arith.constant 0 : i32
    %26 = arith.cmpi eq, %arg1, %c0_i32_14 : i32
    %27 = arith.extui %26 : i1 to i32
    %c0_i32_15 = arith.constant 0 : i32
    %28 = arith.cmpi ne, %27, %c0_i32_15 : i32
    scf.if %28 {
      %cst_16 = arith.constant 0.000000e+00 : f32
      %29 = vector.broadcast %cst_16 : f32 to vector<8x128xf32>
      %c0_17 = arith.constant 0 : index
      %c0_18 = arith.constant 0 : index
      %30 = vector.load %arg6[%c0_17, %c0_18] : memref<16x128xf32, #tpu.memory_space<vmem>>, vector<16x128xf32>
      %31 = vector.shape_cast %30 : vector<16x128xf32> to vector<1x16x128xf32>
      %cst_19 = arith.constant dense<0.000000e+00> : vector<1xf32>
      %32 = vector.multi_reduction <add>, %31, %cst_19 [1, 2] : vector<1x16x128xf32> to vector<1xf32>
      %33 = vector.shape_cast %32 : vector<1xf32> to vector<1x1x1xf32>
      %34 = vector.extract %33[0, 0, 0] : f32 from vector<1x1x1xf32>
      %35 = vector.broadcast %34 : f32 to vector<8x128xf32>
      %36 = arith.addf %29, %35 : vector<8x128xf32>
      %c0_20 = arith.constant 0 : index
      %c0_21 = arith.constant 0 : index
      %37 = vector.load %arg4[%c0_20, %c0_21] : memref<8x128xf32, #tpu.memory_space<vmem>>, vector<8x128xf32>
      tpu.vector_store %arg4[%c0_20, %c0_21], %36 {strides = array<i32>} : memref<8x128xf32, #tpu.memory_space<vmem>>, vector<8x128xf32>,
      %cst_22 = arith.constant 0.000000e+00 : f32
      %38 = vector.broadcast %cst_22 : f32 to vector<8x128xf32>
      %c0_23 = arith.constant 0 : index
      %c0_24 = arith.constant 0 : index
      %39 = vector.load %arg7[%c0_23, %c0_24] : memref<16x128xf32, #tpu.memory_space<vmem>>, vector<16x128xf32>
      %40 = vector.shape_cast %39 : vector<16x128xf32> to vector<1x16x128xf32>
      %cst_25 = arith.constant dense<0.000000e+00> : vector<1xf32>
      %41 = vector.multi_reduction <add>, %40, %cst_25 [1, 2] : vector<1x16x128xf32> to vector<1xf32>
      %42 = vector.shape_cast %41 : vector<1xf32> to vector<1x1x1xf32>
      %43 = vector.extract %42[0, 0, 0] : f32 from vector<1x1x1xf32>
      %44 = vector.broadcast %43 : f32 to vector<8x128xf32>
      %45 = arith.addf %38, %44 : vector<8x128xf32>
      %c0_26 = arith.constant 0 : index
      %c0_27 = arith.constant 0 : index
      %46 = vector.load %arg5[%c0_26, %c0_27] : memref<8x128xf32, #tpu.memory_space<vmem>>, vector<8x128xf32>
      tpu.vector_store %arg5[%c0_26, %c0_27], %45 {strides = array<i32>} : memref<8x128xf32, #tpu.memory_space<vmem>>, vector<8x128xf32>,
    } else {
    }
    return
  }
  func.func @transform_0(%arg0: i32, %arg1: i32) -> (i32, i32) {
    %c1_i32 = arith.constant 1 : i32
    %0 = arith.muli %arg0, %c1_i32 : i32
    %1 = arith.addi %0, %arg1 : i32
    %c0_i32 = arith.constant 0 : i32
    %2 = arith.minsi %1, %c0_i32 : i32
    %c0_i32_0 = arith.constant 0 : i32
    %c0_i32_1 = arith.constant 0 : i32
    return %2, %c0_i32_0 : i32, i32
  }
  func.func @transform_1(%arg0: i32, %arg1: i32) -> (i32, i32) {
    %c1_i32 = arith.constant 1 : i32
    %0 = arith.muli %arg0, %c1_i32 : i32
    %1 = arith.addi %0, %arg1 : i32
    %c0_i32 = arith.constant 0 : i32
    %2 = arith.minsi %1, %c0_i32 : i32
    %c0_i32_0 = arith.constant 0 : i32
    %c0_i32_1 = arith.constant 0 : i32
    return %2, %c0_i32_0 : i32, i32
  }
  func.func @transform_2(%arg0: i32, %arg1: i32) -> (i32, i32) {
    %c0_i32 = arith.constant 0 : i32
    %c0_i32_0 = arith.constant 0 : i32
    return %arg0, %c0_i32 : i32, i32
  }
  func.func @transform_3(%arg0: i32, %arg1: i32) -> (i32, i32) {
    %c0_i32 = arith.constant 0 : i32
    %c0_i32_0 = arith.constant 0 : i32
    return %arg0, %c0_i32 : i32, i32
  }
}

</mosaic_0001>

<llo_original>
// kernel: _loss_forward.1
$region0: #{_loss_forward.1}
  #allocation0 [shape = 'u32[]', space=smem, size = 0x4, offset = 0x4, fixed_abs, tag = 'smem constant byte address 0x4 - core index']
  #allocation1 [shape = 'u32[144,128]{1,0:T(1,128)}', space=vmem, size = 0x12000, scoped, tag = 'internal scratch']
  #allocation2 [shape = 'f32[16,128]{1,0:T(8,128)}', space=vmem, size = 0x2000, scoped, tag = 'scratch operand']
  #allocation3 [shape = 'f32[16,128]{1,0:T(8,128)}', space=vmem, size = 0x2000, scoped, tag = 'scratch operand']
  %s0 = inlined_call_operand.vmem [shape: f32[16,128], index: 0, kind: input, shape index: {}]
  %s1 = inlined_call_operand.vmem [shape: f32[16,128], index: 1, kind: input, shape index: {}]
  %s2 = inlined_call_operand.vmem [shape: f32[16,128], index: 2, kind: output, shape index: {0}]
  %s3 = inlined_call_operand.vmem [shape: f32[16,128], index: 3, kind: output, shape index: {1}]
  %4 = xla_tuple %s2, %s3
  %s5 = sld [smem:[#allocation0]]
  $region57: #{_loss_forward.1} parent=0
    _
  %s7 = ssub.s32 1, %s5
  %s8 = scalar_select 0, %s7, %s5
  loop: start=0, step=1, limit=4
  $region2: #{_loss_forward.1} parent=0 // loop_pre_header
    _
  $region3: #{_loss_forward.1} parent=0 // loop_header
    %s10 = sphi 0, %s14
    %p11 = scmp.ge.s32.totalorder %s10, 4
    %s17 = sphi 0, %s29
    %s18 = sphi 0, %s25
    %s19 = sphi 0, %s17
    %s20 = sphi 0, %s18
    %s21 = sphi 0, %s19
    %s22 = sphi 0, %s20
    %s38 = sphi 0, %s40
    %s41 = sphi 0, %s38
    %s42 = sphi 0, %s41
    %s58 = sphi 0, %s42
    %s70 = sphi 0, %s72
    %s73 = sphi 0, %s70
    %s74 = sphi 0, %s73
    %s90 = sphi 0, %s74
    %s96 = sphi 0, %s98
    %s99 = sphi 0, %s96
    %s100 = sphi 0, %s99
    %s116 = sphi 0, %s100
    %s122 = sphi 0, %s124
    %s125 = sphi 0, %s122
    %s126 = sphi 0, %s125
    %s142 = sphi 0, %s126
  $region4: #{_loss_forward.1} parent=0 // loop_header_branch
    %13 = sbr.rel (%p11) target = $region8
  $region5: #{_loss_forward.1} parent=0 // loop_body
    %s15 = ssub.s32 %s10, 1
    %s16 = ssub.s32 %s10, 2
    %s23 = sadd.s32 1, %s18
    %p24 = scmp.ge.s32.totalorder %s23, 1
    %s25 = scalar_select %p24, 0, %s23
    %s26 = sadd.s32 1, %s17
    %s27 = scalar_select %p24, %s26, %s17
    %p28 = scmp.ge.s32.totalorder %s27, 2
    %s29 = scalar_select %p28, 0, %s27
    %s30 = sadd.s32 %s17, %s18
    %p31 = scmp.lt.s32.totalorder %s30, 0
    %s32 = scalar_select %p31, %s30, 0
    %s33 = sadd.s32 %s29, %s25
    %p34 = scmp.lt.s32.totalorder %s33, 0
    %s35 = scalar_select %p34, %s33, 0
    %s36 = ssub.s32 %s32, %s35
    %p37 = scmp.eq.s32.totalorder %s36, 0
    %s39 = sadd.s32 %s38, 1
    %s40 = scalar_select %p37, %s38, %s39
    %p43 = pneg %p37
    %p44 = scmp.eq.s32.totalorder %s10, 1
    %p45 = por %p43, %p44
    %p46 = scmp.ne.s32.totalorder %s38, %s41
    %p47 = scmp.eq.s32.totalorder %s10, 0
    %p48 = por %p46, %p47
    %p49 = scmp.ne.s32.totalorder %s38, %s41
    %p50 = scmp.eq.s32.totalorder %s15, 1
    %p51 = por %p49, %p50
    %p52 = scmp.ne.s32.totalorder %s41, %s42
    %p53 = scmp.eq.s32.totalorder %s15, 0
    %p54 = por %p52, %p53
    %p55 = scmp.ne.s32.totalorder %s41, %s42
    %p56 = scmp.eq.s32.totalorder %s16, 1
    %p57 = por %p55, %p56
    %p59 = scmp.ne.s32.totalorder %s42, %s58
    %p60 = scmp.eq.s32.totalorder %s16, 0
    %p61 = por %p59, %p60
    %s62 = sadd.s32 %s17, %s18
    %p63 = scmp.lt.s32.totalorder %s62, 0
    %s64 = scalar_select %p63, %s62, 0
    %s65 = sadd.s32 %s29, %s25
    %p66 = scmp.lt.s32.totalorder %s65, 0
    %s67 = scalar_select %p66, %s65, 0
    %s68 = ssub.s32 %s64, %s67
    %p69 = scmp.eq.s32.totalorder %s68, 0
    %s71 = sadd.s32 %s70, 1
    %s72 = scalar_select %p69, %s70, %s71
    %p75 = pneg %p69
    %p76 = scmp.eq.s32.totalorder %s10, 1
    %p77 = por %p75, %p76
    %p78 = scmp.ne.s32.totalorder %s70, %s73
    %p79 = scmp.eq.s32.totalorder %s10, 0
    %p80 = por %p78, %p79
    %p81 = scmp.ne.s32.totalorder %s70, %s73
    %p82 = scmp.eq.s32.totalorder %s15, 1
    %p83 = por %p81, %p82
    %p84 = scmp.ne.s32.totalorder %s73, %s74
    %p85 = scmp.eq.s32.totalorder %s15, 0
    %p86 = por %p84, %p85
    %p87 = scmp.ne.s32.totalorder %s73, %s74
    %p88 = scmp.eq.s32.totalorder %s16, 1
    %p89 = por %p87, %p88
    %p91 = scmp.ne.s32.totalorder %s74, %s90
    %p92 = scmp.eq.s32.totalorder %s16, 0
    %p93 = por %p91, %p92
    %s94 = ssub.s32 %s17, %s29
    %p95 = scmp.eq.s32.totalorder %s94, 0
    %s97 = sadd.s32 %s96, 1
    %s98 = scalar_select %p95, %s96, %s97
    %p101 = pneg %p95
    %p102 = scmp.eq.s32.totalorder %s10, 1
    %p103 = por %p101, %p102
    %p104 = scmp.ne.s32.totalorder %s96, %s99
    %p105 = scmp.eq.s32.totalorder %s10, 0
    %p106 = por %p104, %p105
    %p107 = scmp.ne.s32.totalorder %s96, %s99
    %p108 = scmp.eq.s32.totalorder %s15, 1
    %p109 = por %p107, %p108
    %p110 = scmp.ne.s32.totalorder %s99, %s100
    %p111 = scmp.eq.s32.totalorder %s15, 0
    %p112 = por %p110, %p111
    %p113 = scmp.ne.s32.totalorder %s99, %s100
    %p114 = scmp.eq.s32.totalorder %s16, 1
    %p115 = por %p113, %p114
    %p117 = scmp.ne.s32.totalorder %s100, %s116
    %p118 = scmp.eq.s32.totalorder %s16, 0
    %p119 = por %p117, %p118
    %s120 = ssub.s32 %s17, %s29
    %p121 = scmp.eq.s32.totalorder %s120, 0
    %s123 = sadd.s32 %s122, 1
    %s124 = scalar_select %p121, %s122, %s123
    %p127 = pneg %p121
    %p128 = scmp.eq.s32.totalorder %s10, 1
    %p129 = por %p127, %p128
    %p130 = scmp.ne.s32.totalorder %s122, %s125
    %p131 = scmp.eq.s32.totalorder %s10, 0
    %p132 = por %p130, %p131
    %p133 = scmp.ne.s32.totalorder %s122, %s125
    %p134 = scmp.eq.s32.totalorder %s15, 1
    %p135 = por %p133, %p134
    %p136 = scmp.ne.s32.totalorder %s125, %s126
    %p137 = scmp.eq.s32.totalorder %s15, 0
    %p138 = por %p136, %p137
    %p139 = scmp.ne.s32.totalorder %s125, %s126
    %p140 = scmp.eq.s32.totalorder %s16, 1
    %p141 = por %p139, %p140
    %p143 = scmp.ne.s32.totalorder %s126, %s142
    %p144 = scmp.eq.s32.totalorder %s16, 0
    %p145 = por %p143, %p144
    %p146 = scmp.le.s32.totalorder 1, %s10
    %p147 = scmp.lt.s32.totalorder %s10, 3
    %p148 = pnand %p146, %p147
    %p149 = pneg %p148
    // Predicated region
    $region9: #{_loss_forward.1} parent=5 // pred_check
      _
    $region10: #{_loss_forward.1} parent=5 // pred_check_branch
      %151 = sbr.rel (%p148) target = $region12
    $region11: #{_loss_forward.1} parent=5 // pred_region
      %s152 = ssub.s32 %s10, 1
    $region12: #{_loss_forward.1} parent=5 // pred_fallthru
      _
    %p153 = scmp.lt.s32.totalorder %s10, 2
    // Predicated region
    $region13: #{_loss_forward.1} parent=5 // pred_check
      %p154 = pneg %p153
    $region14: #{_loss_forward.1} parent=5 // pred_check_branch
      %156 = sbr.rel (%p154) target = $region16
    $region15: #{_loss_forward.1} parent=5 // pred_region
      // Predicated region
      $region17: #{_loss_forward.1} parent=15 // pred_check
        %p157 = pneg %p48
      $region18: #{_loss_forward.1} parent=15 // pred_check_branch
        %159 = sbr.rel (%p157) target = $region20
      $region19: #{_loss_forward.1} parent=15 // pred_region
        %s160 = sadd.s32 %s17, %s18
        %p161 = scmp.lt.s32.totalorder %s160, 0
        %s162 = scalar_select %p161, %s160, 0
        %s163 = smul.u32 2, %s162
        %p164 = scmp.lt.s32.totalorder %s163, 1
        %s165 = scalar_select %p164, %s163, 1
        %s166 = smul.addr %s165, 8
        %s167 = scalar_lea.vmem %s0, %s166
        %s168 = sadd.s32 %s17, %s18
        %p169 = scmp.lt.s32.totalorder %s168, 0
        %s170 = scalar_select %p169, %s168, 0
        %s171 = smul.u32 2, %s170
      $region20: #{_loss_forward.1} parent=15 // pred_fallthru
        _
      // Predicated region
      $region21: #{_loss_forward.1} parent=15 // pred_check
        %p172 = pneg %p80
      $region22: #{_loss_forward.1} parent=15 // pred_check_branch
        %174 = sbr.rel (%p172) target = $region24
      $region23: #{_loss_forward.1} parent=15 // pred_region
        %s175 = sadd.s32 %s17, %s18
        %p176 = scmp.lt.s32.totalorder %s175, 0
        %s177 = scalar_select %p176, %s175, 0
        %s178 = smul.u32 2, %s177
        %p179 = scmp.lt.s32.totalorder %s178, 1
        %s180 = scalar_select %p179, %s178, 1
        %s181 = smul.addr %s180, 8
        %s182 = scalar_lea.vmem %s1, %s181
        %s183 = sadd.s32 %s17, %s18
        %p184 = scmp.lt.s32.totalorder %s183, 0
        %s185 = scalar_select %p184, %s183, 0
        %s186 = smul.u32 2, %s185
      $region24: #{_loss_forward.1} parent=15 // pred_fallthru
        _
    $region16: #{_loss_forward.1} parent=5 // pred_fallthru
      _
    %p187 = scmp.le.s32.totalorder 1, %s10
    %p188 = scmp.lt.s32.totalorder %s10, 3
    %p189 = pnand %p187, %p188
    %p190 = pneg %p189
    // Predicated region
    $region25: #{_loss_forward.1} parent=5 // pred_check
      _
    $region26: #{_loss_forward.1} parent=5 // pred_check_branch
      %192 = sbr.rel (%p189) target = $region28
    $region27: #{_loss_forward.1} parent=5 // pred_region
      %s193 = ssub.s32 %s10, 1
      %s194 = sadd.s32 %s19, %s20
      %p195 = scmp.lt.s32.totalorder %s194, 0
      %s196 = scalar_select %p195, %s194, 0
      %s197 = smul.u32 2, %s196
      %p198 = scmp.lt.s32.totalorder %s197, 1
      %s199 = scalar_select %p198, %s197, 1
      %s200 = smul.addr %s199, 8
      %s201 = scalar_lea.vmem %s0, %s200
      %p202 = pneg %p54
      %p203 = pneg %p51
      %s204 = sadd.s32 %s19, %s20
      %p205 = scmp.lt.s32.totalorder %s204, 0
      %s206 = scalar_select %p205, %s204, 0
      %s207 = smul.u32 2, %s206
      %p208 = scmp.lt.s32.totalorder %s207, 1
      %s209 = scalar_select %p208, %s207, 1
      %s210 = smul.addr %s209, 8
      %s211 = scalar_lea.vmem %s1, %s210
      %p212 = pneg %p86
      %p213 = pneg %p83
      %p214 = pneg %p112
      %p215 = pneg %p109
      %p216 = scmp.lt.s32.totalorder %s19, 1
      %s217 = scalar_select %p216, %s19, 1
      %s218 = smul.addr %s217, 8
      %s219 = scalar_lea.vmem %s2, %s218
      %p220 = pneg %p138
      %p221 = pneg %p135
      %p222 = scmp.lt.s32.totalorder %s19, 1
      %s223 = scalar_select %p222, %s19, 1
      %s224 = smul.addr %s223, 8
      %s225 = scalar_lea.vmem %s3, %s224
      %s226 = sadd.s32 %s19, %s20
      %p227 = scmp.lt.s32.totalorder %s226, 0
      %s228 = scalar_select %p227, %s226, 0
      %s229 = smul.u32 2, %s228
      %p230 = scmp.lt.s32.totalorder %s229, 1
      %s231 = scalar_select %p230, %s229, 1
      %s232 = smul.addr %s231, 8
      %s233 = scalar_lea.vmem %s0, %s232
      %s234 = sadd.s32 %s19, %s20
      %p235 = scmp.lt.s32.totalorder %s234, 0
      %s236 = scalar_select %p235, %s234, 0
      %s237 = smul.u32 2, %s236
      %s238 = sadd.s32 %s19, %s20
      %p239 = scmp.lt.s32.totalorder %s238, 0
      %s240 = scalar_select %p239, %s238, 0
      %s241 = smul.u32 2, %s240
      %p242 = scmp.lt.s32.totalorder %s241, 1
      %s243 = scalar_select %p242, %s241, 1
      %s244 = smul.addr %s243, 8
      %s245 = scalar_lea.vmem %s1, %s244
      %s246 = sadd.s32 %s19, %s20
      %p247 = scmp.lt.s32.totalorder %s246, 0
      %s248 = scalar_select %p247, %s246, 0
      %s249 = smul.u32 2, %s248
      %p250 = scmp.lt.s32.totalorder %s19, 1
      %s251 = scalar_select %p250, %s19, 1
      %s252 = smul.addr %s251, 8
      %s253 = scalar_lea.vmem %s2, %s252
      %p254 = scmp.lt.s32.totalorder %s19, 1
      %s255 = scalar_select %p254, %s19, 1
      %s256 = smul.addr %s255, 8
      %s257 = scalar_lea.vmem %s3, %s256
      %p258 = scmp.eq.s32.totalorder %s20, 0
      // Predicated region
      $region29: #{_loss_forward.1} parent=27 // pred_check
        %p259 = pneg %p258
      $region30: #{_loss_forward.1} parent=27 // pred_check_branch
        %261 = sbr.rel (%p259) target = $region32
      $region31: #{_loss_forward.1} parent=27 // pred_region
        %262 = vst [vmem:[#allocation2] sm:$0xff] 0.0
        %263 = vst [vmem:[#allocation2 + $0x8] sm:$0xff] 0.0
        %264 = vst [vmem:[#allocation3] sm:$0xff] 0.0
        %265 = vst [vmem:[#allocation3 + $0x8] sm:$0xff] 0.0
      $region32: #{_loss_forward.1} parent=27 // pred_fallthru
        _
      %v266 = vld [vmem:[%s233] sm:$0xff]
      %v267 = vld [vmem:[%s233 + $0x8] sm:$0xff]
      %v268 = vld [vmem:[%s245] sm:$0xff]
      %v269 = vld [vmem:[%s245 + $0x8] sm:$0xff]
      %v270 = vsub.f32 %v266, %v268
      %v271 = vsub.f32 %v267, %v269
      %s272 = sadd.s32 %s19, %s20
      %s273 = smul.u32 %s272, 16
      %v274 = vlaneseq
      %v275 = vshrl.u32 %v274, 7
      %v276 = vadd.s32 %v275, 8
      %v277 = vstv %s273
      %v278 = vadd.s32 %v277, %v275
      %v279 = vadd.s32 %v277, %v276
      %vm280 = vcmp.lt.s32.totalorder %v278, 16
      %vm281 = vcmp.lt.s32.totalorder %v279, 16
      %v282 = vld [vmem:[#allocation2] sm:$0xff]
      %v283 = vld [vmem:[#allocation2 + $0x8] sm:$0xff]
      %v284 = vmul.f32 %v270, %v270
      %v285 = vmul.f32 %v271, %v271
      %v286 = vsel %vm280, %v284, 0.0
      %v287 = vsel %vm281, %v285, 0.0
      %v288 = vadd.f32 %v282, %v286
      %v289 = vadd.f32 %v283, %v287
      %290 = vst [vmem:[#allocation2] sm:$0xff] %v288
      %291 = vst [vmem:[#allocation2 + $0x8] sm:$0xff] %v289
      %v292 = vld [vmem:[#allocation3] sm:$0xff]
      %v293 = vld [vmem:[#allocation3 + $0x8] sm:$0xff]
      %v294 = vand.u32 2147483647, %v270
      %v295 = vand.u32 2147483647, %v271
      %v296 = vsel %vm280, %v294, 0.0
      %v297 = vsel %vm281, %v295, 0.0
      %v298 = vadd.f32 %v292, %v296
      %v299 = vadd.f32 %v293, %v297
      %300 = vst [vmem:[#allocation3] sm:$0xff] %v298
      %301 = vst [vmem:[#allocation3 + $0x8] sm:$0xff] %v299
      // Predicated region
      $region33: #{_loss_forward.1} parent=27 // pred_check
        %p302 = pneg %p258
      $region34: #{_loss_forward.1} parent=27 // pred_check_branch
        %304 = sbr.rel (%p302) target = $region36
      $region35: #{_loss_forward.1} parent=27 // pred_region
        %v305 = vld [vmem:[#allocation2] sm:$0xff]
        %v306 = vld [vmem:[#allocation2 + $0x8] sm:$0xff]
        %v307 = vadd.f32 %v305, %v306
        %308 = vadd.xlane.f32.xlu0 %v307
        %v309 = vpop.xlane.xlu0 %308
        %v310 = vrot.slane %v309, 4
        %v311 = vadd.f32 %v309, %v310
        %v312 = vrot.slane %v311, 2
        %v313 = vadd.f32 %v311, %v312
        %v314 = vrot.slane %v313, 1
        %v315 = vadd.f32 %v313, %v314
        %s316 = vtos %v315
        %v317 = vstv %s316
        %v318 = vadd.f32 %v317, 0.0
        %319 = vst [vmem:[%s253] sm:$0xff] %v318
        %v320 = vld [vmem:[#allocation3] sm:$0xff]
        %v321 = vld [vmem:[#allocation3 + $0x8] sm:$0xff]
        %v322 = vadd.f32 %v320, %v321
        %323 = vadd.xlane.f32.xlu0 %v322
        %v324 = vpop.xlane.xlu0 %323
        %v325 = vrot.slane %v324, 4
        %v326 = vadd.f32 %v324, %v325
        %v327 = vrot.slane %v326, 2
        %v328 = vadd.f32 %v326, %v327
        %v329 = vrot.slane %v328, 1
        %v330 = vadd.f32 %v328, %v329
        %s331 = vtos %v330
        %v332 = vstv %s331
        %v333 = vadd.f32 %v332, 0.0
        %334 = vst [vmem:[%s257] sm:$0xff] %v333
      $region36: #{_loss_forward.1} parent=27 // pred_fallthru
        _
      %p335 = scmp.lt.s32.totalorder %s19, 1
      %s336 = scalar_select %p335, %s19, 1
      %s337 = smul.addr %s336, 8
      %s338 = scalar_lea.vmem %s2, %s337
      %p339 = scmp.lt.s32.totalorder %s19, 1
      %s340 = scalar_select %p339, %s19, 1
      %s341 = smul.addr %s340, 8
      %s342 = scalar_lea.vmem %s3, %s341
      // Predicated region
      $region37: #{_loss_forward.1} parent=27 // pred_check
        %p343 = pneg %p109
      $region38: #{_loss_forward.1} parent=27 // pred_check_branch
        %345 = sbr.rel (%p343) target = $region40
      $region39: #{_loss_forward.1} parent=27 // pred_region
        _
      $region40: #{_loss_forward.1} parent=27 // pred_fallthru
        _
      // Predicated region
      $region41: #{_loss_forward.1} parent=27 // pred_check
        %p346 = pneg %p135
      $region42: #{_loss_forward.1} parent=27 // pred_check_branch
        %348 = sbr.rel (%p346) target = $region44
      $region43: #{_loss_forward.1} parent=27 // pred_region
        _
      $region44: #{_loss_forward.1} parent=27 // pred_fallthru
        _
    $region28: #{_loss_forward.1} parent=5 // pred_fallthru
      _
    %p349 = scmp.le.s32.totalorder 2, %s10
    // Predicated region
    $region45: #{_loss_forward.1} parent=5 // pred_check
      %p350 = pneg %p349
    $region46: #{_loss_forward.1} parent=5 // pred_check_branch
      %352 = sbr.rel (%p350) target = $region48
    $region47: #{_loss_forward.1} parent=5 // pred_region
      %s353 = ssub.s32 %s10, 2
      // Predicated region
      $region49: #{_loss_forward.1} parent=47 // pred_check
        %p354 = pneg %p115
      $region50: #{_loss_forward.1} parent=47 // pred_check_branch
        %356 = sbr.rel (%p354) target = $region52
      $region51: #{_loss_forward.1} parent=47 // pred_region
        %p357 = scmp.lt.s32.totalorder %s21, 1
        %s358 = scalar_select %p357, %s21, 1
        %s359 = smul.addr %s358, 8
        %s360 = scalar_lea.vmem %s2, %s359
      $region52: #{_loss_forward.1} parent=47 // pred_fallthru
        _
      // Predicated region
      $region53: #{_loss_forward.1} parent=47 // pred_check
        %p361 = pneg %p141
      $region54: #{_loss_forward.1} parent=47 // pred_check_branch
        %363 = sbr.rel (%p361) target = $region56
      $region55: #{_loss_forward.1} parent=47 // pred_region
        %p364 = scmp.lt.s32.totalorder %s21, 1
        %s365 = scalar_select %p364, %s21, 1
        %s366 = smul.addr %s365, 8
        %s367 = scalar_lea.vmem %s3, %s366
      $region56: #{_loss_forward.1} parent=47 // pred_fallthru
        _
    $region48: #{_loss_forward.1} parent=5 // pred_fallthru
      _
  $region6: #{_loss_forward.1} parent=0 // loop_footer
    %s14 = sadd.s32 1, %s10
  $region7: #{_loss_forward.1} parent=0 // loop_footer_branch
    %9 = sbr.rel target = $region3
  $region8: #{_loss_forward.1} parent=0 // loop_exit
    _

</llo_original>
